<compile_context>
chip_gen: v7x
topology: tpu7x:2x2x1
jax: 0.10.0
libtpu: 0.0.40
codegen_flags: <defaults>
</compile_context>

<pallas_src>
import jax
import jax.numpy as jnp
from jax.experimental import pallas as pl
from jax.experimental.pallas import tpu as pltpu


NUM_LAYERS = 5          # linear1, linear1_1, linear1_2, linear1_3, linear2
BN_EPS = 1e-5


def _make_kernel(input_size, hidden_size, batch):
    IN, H, B = input_size, hidden_size, batch
    W0_OFF = 0
    WH_OFF = IN
    W4_OFF = IN + 3 * H
    G_OFF = W4_OFF + 1
    B_OFF = G_OFF + NUM_LAYERS

    def kernel(x_ref, p_ref, out_ref):
        # x_ref  : (1, B, IN)  f32  current batch block
        # p_ref  : (ROWS, H)   f32  packed parameter slab (VMEM-resident across grid)
        # out_ref: (1, 1, B)   f32  lane-dense output row
        def bn_fold(z, layer):
            f = z.shape[-1]
            # single-pass batch stats, one fused sublane reduction over [z, z*z]
            stats = jnp.mean(jnp.concatenate([z, z * z], axis=-1),
                             axis=0, keepdims=True)                  # (1, 2f)
            m, m2 = stats[:, :f], stats[:, f:]
            var = jnp.maximum(m2 - m * m, 0.0)
            s = p_ref[G_OFF + layer:G_OFF + layer + 1, :f] * jax.lax.rsqrt(var + BN_EPS)
            t = p_ref[B_OFF + layer:B_OFF + layer + 1, :f] - m * s
            return z * s + t

        h = x_ref[0]                                                  # (B, IN)

        # Layer 0: (B, IN) @ (IN, H)
        h = jnp.dot(h, p_ref[W0_OFF:W0_OFF + IN, :],
                    preferred_element_type=jnp.float32)
        h = jnp.maximum(bn_fold(h, 0), 0.0)

        # Layers 1..3: (B, H) @ (H, H)
        for j in range(3):
            w = p_ref[WH_OFF + j * H:WH_OFF + (j + 1) * H, :]
            h = jnp.dot(h, w, preferred_element_type=jnp.float32)
            h = jnp.maximum(bn_fold(h, j + 1), 0.0)

        # Output layer (output_size == 1): VPU multiply + lane reduce (no N=1 MXU pass)
        z = jnp.sum(h * p_ref[W4_OFF:W4_OFF + 1, :], axis=-1, keepdims=True)   # (B, 1)
        y = jax.nn.sigmoid(bn_fold(z, NUM_LAYERS - 1))                         # (B, 1)

        # (B, 1) -> (1, B) via one-hot sublane reduction, then lane-dense store.
        row = jax.lax.broadcasted_iota(jnp.int32, (B, B), 0)
        col = jax.lax.broadcasted_iota(jnp.int32, (B, B), 1)
        onehot = (row == col).astype(jnp.float32)
        out_ref[0] = jnp.sum(y * onehot, axis=0, keepdims=True)                # (1, B)

    return kernel


def solution_model_forward(x, params):
    """x: (num_batches, batch, in) or (batch, in); params: packed slab (rows, hidden)."""
    if x.ndim == 2:
        return solution_model_forward(x[None], params)[0]
    nb, batch, input_size = x.shape
    rows, hidden = params.shape
    assert rows == input_size + 3 * hidden + 1 + 2 * NUM_LAYERS, "bad param slab"

    kernel = _make_kernel(input_size, hidden, batch)

    matmul_flops = 2 * batch * (input_size * hidden + 3 * hidden * hidden + hidden)
    cost = pl.CostEstimate(
        flops=int(nb * (matmul_flops + 10 * batch * hidden)),
        transcendentals=int(nb * (NUM_LAYERS * hidden + batch)),
        bytes_accessed=int((x.size + params.size + nb * batch) * 4),
    )

    out = pl.pallas_call(
        kernel,
        out_shape=jax.ShapeDtypeStruct((nb, 1, batch), jnp.float32),
        grid_spec=pltpu.PrefetchScalarGridSpec(
            num_scalar_prefetch=0,
            grid=(nb,),
            in_specs=[
                pl.BlockSpec((1, batch, input_size), lambda b: (b, 0, 0)),
                pl.BlockSpec((rows, hidden), lambda b: (0, 0)),   # weights stay resident
            ],
            out_specs=pl.BlockSpec((1, 1, batch), lambda b: (b, 0, 0)),
        ),
        compiler_params=pltpu.CompilerParams(dimension_semantics=("parallel",)),
        cost_estimate=cost,
    )(x, params)
    return jnp.transpose(out, (0, 2, 1))        # (nb, batch, 1)


def init_torch_like_params(key, input_size, hidden_size, output_size):
    """Synthetic PyTorch-style params (incl. linear biases, used by the reference)."""
    sizes = ([(input_size, hidden_size)]
             + [(hidden_size, hidden_size)] * 3
             + [(hidden_size, output_size)])
    Ws, Bs, Gs, Betas = [], [], [], []
    for fan_in, fan_out in sizes:
        key, kw, kb, kg, kbt = jax.random.split(key, 5)
        bound = 1.0 / (fan_in ** 0.5)
        Ws.append(jax.random.uniform(kw, (fan_in, fan_out), jnp.float32, -bound, bound))
        Bs.append(jax.random.uniform(kb, (1, fan_out), jnp.float32, -bound, bound))
        Gs.append(jax.random.uniform(kg, (1, fan_out), jnp.float32, 0.5, 1.5))
        Betas.append(0.1 * jax.random.normal(kbt, (1, fan_out), jnp.float32))
    return Ws, Bs, Gs, Betas


def pack_kernel_params(Ws, Gs, Betas, input_size, hidden_size):
    """Pack all kernel params into one (rows, hidden) slab.

    Linear biases are deliberately omitted: every Linear is immediately followed by
    BatchNorm1d(track_running_stats=False), whose batch-mean subtraction cancels a
    per-feature bias exactly. (Invalid if anything were inserted between Linear and BN.)
    """
    assert Ws[4].shape[1] == 1, "kernel is specialized for output_size == 1"
    rows = input_size + 3 * hidden_size + 1 + 2 * NUM_LAYERS
    slab = jnp.zeros((rows, hidden_size), jnp.float32)
    slab = slab.at[0:input_size, :].set(Ws[0])                          # (in, H)
    for j in range(3):
        off = input_size + j * hidden_size
        slab = slab.at[off:off + hidden_size, :].set(Ws[1 + j])         # (H, H)
    w4_off = input_size + 3 * hidden_size
    slab = slab.at[w4_off, :].set(Ws[4][:, 0])                          # (H,) row
    g_off = w4_off + 1
    b_off = g_off + NUM_LAYERS
    for i in range(NUM_LAYERS):
        width = Gs[i].shape[1]
        slab = slab.at[g_off + i, :width].set(Gs[i][0])
        slab = slab.at[b_off + i, :width].set(Betas[i][0])
    return slab


def reference_forward(x, Ws, Bs, Gs, Betas):
    """Pure-JAX replica of the PyTorch forward (with biases, two-pass variance)."""
    h = x.astype(jnp.float32)
    for i in range(NUM_LAYERS):
        h = h @ Ws[i] + Bs[i]
        m = jnp.mean(h, axis=0, keepdims=True)
        v = jnp.mean((h - m) ** 2, axis=0, keepdims=True)
        h = (h - m) * jax.lax.rsqrt(v + BN_EPS) * Gs[i] + Betas[i]
        h = jnp.maximum(h, 0.0) if i < NUM_LAYERS - 1 else jax.nn.sigmoid(h)
    return h


if __name__ == "__main__":
    num_batches, batch, input_size, hidden_size, output_size = 4, 8, 16, 32, 1

    key = jax.random.PRNGKey(0)
    key, kx = jax.random.split(key)
    x = jax.random.normal(kx, (num_batches, batch, input_size), jnp.float32)

    Ws, Bs, Gs, Betas = init_torch_like_params(key, input_size, hidden_size, output_size)
    slab = pack_kernel_params(Ws, Gs, Betas, input_size, hidden_size)

    out = solution_model_forward(x, slab)
    out = jax.block_until_ready(out)

    ref = jnp.stack([reference_forward(x[i], Ws, Bs, Gs, Betas)
                     for i in range(num_batches)])
    assert out.shape == (num_batches, batch, output_size)
    assert float(jnp.max(jnp.abs(out - ref))) < 1e-4, "mismatch vs reference"

    print("KERNEL_OK")
</pallas_src>

<mosaic_0001>
module attributes {stable_mosaic.version = 11 : i64} {
  func.func @kernel(%arg0: i32, %arg1: memref<1x8x16xf32, #tpu.memory_space<vmem>>, %arg2: memref<123x32xf32, #tpu.memory_space<vmem>>, %arg3: memref<1x1x8xf32, #tpu.memory_space<vmem>>) attributes {dimension_semantics = [#tpu.dimension_semantics<parallel>], iteration_bounds = array<i64: 4>, scalar_prefetch = 0 : i64, scratch_operands = 0 : i64, tpu.core_type = #tpu.core_type<tc>, window_params = [{transform_indices = @transform_0, window_bounds = array<i64: 1, 8, 16>}, {pipeline_mode = #tpu.pipeline_mode<synchronous>, transform_indices = @transform_1, window_bounds = array<i64: 123, 32>}, {transform_indices = @transform_2, window_bounds = array<i64: 1, 1, 8>}]} {
    %c0 = arith.constant 0 : index
    %c0_0 = arith.constant 0 : index
    %c0_1 = arith.constant 0 : index
    %0 = vector.load %arg1[%c0, %c0_0, %c0_1] : memref<1x8x16xf32, #tpu.memory_space<vmem>>, vector<1x8x16xf32>
    %1 = vector.shape_cast %0 : vector<1x8x16xf32> to vector<8x16xf32>
    %c0_2 = arith.constant 0 : index
    %c0_3 = arith.constant 0 : index
    %2 = vector.load %arg2[%c0_2, %c0_3] : memref<123x32xf32, #tpu.memory_space<vmem>>, vector<16x32xf32>
    %cst = arith.constant dense<0.000000e+00> : vector<8x32xf32>
    %3 = tpu.matmul %1, %2, %cst {dimension_numbers = #tpu.dot_dimension_numbers<[1], [0], [0], [1], [0, 0, 1, 1], [], []>} : vector<8x16xf32>, vector<16x32xf32>, vector<8x32xf32> -> vector<8x32xf32>
    %4 = arith.mulf %3, %3 : vector<8x32xf32>
    %5 = tpu.concatenate %3, %4 in 1 : vector<8x32xf32>, vector<8x32xf32> -> vector<8x64xf32>
    %cst_4 = arith.constant dense<0.000000e+00> : vector<64xf32>
    %6 = vector.multi_reduction <add>, %5, %cst_4 [0] : vector<8x64xf32> to vector<64xf32>
    %7 = vector.shape_cast %6 : vector<64xf32> to vector<1x64xf32>
    %cst_5 = arith.constant 8.000000e+00 : f32
    %8 = vector.broadcast %cst_5 : f32 to vector<1x64xf32>
    %9 = arith.divf %7, %8 : vector<1x64xf32>
    %10 = vector.extract_strided_slice %9 {offsets = [0, 0], sizes = [1, 32], strides = [1, 1]} : vector<1x64xf32> to vector<1x32xf32>
    %11 = vector.extract_strided_slice %9 {offsets = [0, 32], sizes = [1, 32], strides = [1, 1]} : vector<1x64xf32> to vector<1x32xf32>
    %12 = arith.mulf %10, %10 : vector<1x32xf32>
    %13 = arith.subf %11, %12 : vector<1x32xf32>
    %cst_6 = arith.constant 0.000000e+00 : f32
    %14 = vector.broadcast %cst_6 : f32 to vector<1x32xf32>
    %15 = arith.maximumf %13, %14 : vector<1x32xf32>
    %c113 = arith.constant 113 : index
    %c0_7 = arith.constant 0 : index
    %16 = vector.load %arg2[%c113, %c0_7] : memref<123x32xf32, #tpu.memory_space<vmem>>, vector<1x32xf32>
    %cst_8 = arith.constant 9.99999974E-6 : f32
    %17 = vector.broadcast %cst_8 : f32 to vector<1x32xf32>
    %18 = arith.addf %15, %17 : vector<1x32xf32>
    %19 = math.rsqrt %18 : vector<1x32xf32>
    %20 = arith.mulf %16, %19 : vector<1x32xf32>
    %c118 = arith.constant 118 : index
    %c0_9 = arith.constant 0 : index
    %21 = vector.load %arg2[%c118, %c0_9] : memref<123x32xf32, #tpu.memory_space<vmem>>, vector<1x32xf32>
    %22 = arith.mulf %10, %20 : vector<1x32xf32>
    %23 = arith.subf %21, %22 : vector<1x32xf32>
    %24 = vector.broadcast %20 : vector<1x32xf32> to vector<8x32xf32>
    %25 = arith.mulf %3, %24 : vector<8x32xf32>
    %26 = vector.broadcast %23 : vector<1x32xf32> to vector<8x32xf32>
    %27 = arith.addf %25, %26 : vector<8x32xf32>
    %cst_10 = arith.constant 0.000000e+00 : f32
    %28 = vector.broadcast %cst_10 : f32 to vector<8x32xf32>
    %29 = arith.maximumf %27, %28 : vector<8x32xf32>
    %c16 = arith.constant 16 : index
    %c0_11 = arith.constant 0 : index
    %30 = vector.load %arg2[%c16, %c0_11] : memref<123x32xf32, #tpu.memory_space<vmem>>, vector<32x32xf32>
    %cst_12 = arith.constant dense<0.000000e+00> : vector<8x32xf32>
    %31 = tpu.matmul %29, %30, %cst_12 {dimension_numbers = #tpu.dot_dimension_numbers<[1], [0], [0], [1], [0, 0, 1, 1], [], []>} : vector<8x32xf32>, vector<32x32xf32>, vector<8x32xf32> -> vector<8x32xf32>
    %32 = arith.mulf %31, %31 : vector<8x32xf32>
    %33 = tpu.concatenate %31, %32 in 1 : vector<8x32xf32>, vector<8x32xf32> -> vector<8x64xf32>
    %cst_13 = arith.constant dense<0.000000e+00> : vector<64xf32>
    %34 = vector.multi_reduction <add>, %33, %cst_13 [0] : vector<8x64xf32> to vector<64xf32>
    %35 = vector.shape_cast %34 : vector<64xf32> to vector<1x64xf32>
    %cst_14 = arith.constant 8.000000e+00 : f32
    %36 = vector.broadcast %cst_14 : f32 to vector<1x64xf32>
    %37 = arith.divf %35, %36 : vector<1x64xf32>
    %38 = vector.extract_strided_slice %37 {offsets = [0, 0], sizes = [1, 32], strides = [1, 1]} : vector<1x64xf32> to vector<1x32xf32>
    %39 = vector.extract_strided_slice %37 {offsets = [0, 32], sizes = [1, 32], strides = [1, 1]} : vector<1x64xf32> to vector<1x32xf32>
    %40 = arith.mulf %38, %38 : vector<1x32xf32>
    %41 = arith.subf %39, %40 : vector<1x32xf32>
    %cst_15 = arith.constant 0.000000e+00 : f32
    %42 = vector.broadcast %cst_15 : f32 to vector<1x32xf32>
    %43 = arith.maximumf %41, %42 : vector<1x32xf32>
    %c114 = arith.constant 114 : index
    %c0_16 = arith.constant 0 : index
    %44 = vector.load %arg2[%c114, %c0_16] : memref<123x32xf32, #tpu.memory_space<vmem>>, vector<1x32xf32>
    %cst_17 = arith.constant 9.99999974E-6 : f32
    %45 = vector.broadcast %cst_17 : f32 to vector<1x32xf32>
    %46 = arith.addf %43, %45 : vector<1x32xf32>
    %47 = math.rsqrt %46 : vector<1x32xf32>
    %48 = arith.mulf %44, %47 : vector<1x32xf32>
    %c119 = arith.constant 119 : index
    %c0_18 = arith.constant 0 : index
    %49 = vector.load %arg2[%c119, %c0_18] : memref<123x32xf32, #tpu.memory_space<vmem>>, vector<1x32xf32>
    %50 = arith.mulf %38, %48 : vector<1x32xf32>
    %51 = arith.subf %49, %50 : vector<1x32xf32>
    %52 = vector.broadcast %48 : vector<1x32xf32> to vector<8x32xf32>
    %53 = arith.mulf %31, %52 : vector<8x32xf32>
    %54 = vector.broadcast %51 : vector<1x32xf32> to vector<8x32xf32>
    %55 = arith.addf %53, %54 : vector<8x32xf32>
    %cst_19 = arith.constant 0.000000e+00 : f32
    %56 = vector.broadcast %cst_19 : f32 to vector<8x32xf32>
    %57 = arith.maximumf %55, %56 : vector<8x32xf32>
    %c48 = arith.constant 48 : index
    %c0_20 = arith.constant 0 : index
    %58 = vector.load %arg2[%c48, %c0_20] : memref<123x32xf32, #tpu.memory_space<vmem>>, vector<32x32xf32>
    %cst_21 = arith.constant dense<0.000000e+00> : vector<8x32xf32>
    %59 = tpu.matmul %57, %58, %cst_21 {dimension_numbers = #tpu.dot_dimension_numbers<[1], [0], [0], [1], [0, 0, 1, 1], [], []>} : vector<8x32xf32>, vector<32x32xf32>, vector<8x32xf32> -> vector<8x32xf32>
    %60 = arith.mulf %59, %59 : vector<8x32xf32>
    %61 = tpu.concatenate %59, %60 in 1 : vector<8x32xf32>, vector<8x32xf32> -> vector<8x64xf32>
    %cst_22 = arith.constant dense<0.000000e+00> : vector<64xf32>
    %62 = vector.multi_reduction <add>, %61, %cst_22 [0] : vector<8x64xf32> to vector<64xf32>
    %63 = vector.shape_cast %62 : vector<64xf32> to vector<1x64xf32>
    %cst_23 = arith.constant 8.000000e+00 : f32
    %64 = vector.broadcast %cst_23 : f32 to vector<1x64xf32>
    %65 = arith.divf %63, %64 : vector<1x64xf32>
    %66 = vector.extract_strided_slice %65 {offsets = [0, 0], sizes = [1, 32], strides = [1, 1]} : vector<1x64xf32> to vector<1x32xf32>
    %67 = vector.extract_strided_slice %65 {offsets = [0, 32], sizes = [1, 32], strides = [1, 1]} : vector<1x64xf32> to vector<1x32xf32>
    %68 = arith.mulf %66, %66 : vector<1x32xf32>
    %69 = arith.subf %67, %68 : vector<1x32xf32>
    %cst_24 = arith.constant 0.000000e+00 : f32
    %70 = vector.broadcast %cst_24 : f32 to vector<1x32xf32>
    %71 = arith.maximumf %69, %70 : vector<1x32xf32>
    %c115 = arith.constant 115 : index
    %c0_25 = arith.constant 0 : index
    %72 = vector.load %arg2[%c115, %c0_25] : memref<123x32xf32, #tpu.memory_space<vmem>>, vector<1x32xf32>
    %cst_26 = arith.constant 9.99999974E-6 : f32
    %73 = vector.broadcast %cst_26 : f32 to vector<1x32xf32>
    %74 = arith.addf %71, %73 : vector<1x32xf32>
    %75 = math.rsqrt %74 : vector<1x32xf32>
    %76 = arith.mulf %72, %75 : vector<1x32xf32>
    %c120 = arith.constant 120 : index
    %c0_27 = arith.constant 0 : index
    %77 = vector.load %arg2[%c120, %c0_27] : memref<123x32xf32, #tpu.memory_space<vmem>>, vector<1x32xf32>
    %78 = arith.mulf %66, %76 : vector<1x32xf32>
    %79 = arith.subf %77, %78 : vector<1x32xf32>
    %80 = vector.broadcast %76 : vector<1x32xf32> to vector<8x32xf32>
    %81 = arith.mulf %59, %80 : vector<8x32xf32>
    %82 = vector.broadcast %79 : vector<1x32xf32> to vector<8x32xf32>
    %83 = arith.addf %81, %82 : vector<8x32xf32>
    %cst_28 = arith.constant 0.000000e+00 : f32
    %84 = vector.broadcast %cst_28 : f32 to vector<8x32xf32>
    %85 = arith.maximumf %83, %84 : vector<8x32xf32>
    %c80 = arith.constant 80 : index
    %c0_29 = arith.constant 0 : index
    %86 = vector.load %arg2[%c80, %c0_29] : memref<123x32xf32, #tpu.memory_space<vmem>>, vector<32x32xf32>
    %cst_30 = arith.constant dense<0.000000e+00> : vector<8x32xf32>
    %87 = tpu.matmul %85, %86, %cst_30 {dimension_numbers = #tpu.dot_dimension_numbers<[1], [0], [0], [1], [0, 0, 1, 1], [], []>} : vector<8x32xf32>, vector<32x32xf32>, vector<8x32xf32> -> vector<8x32xf32>
    %88 = arith.mulf %87, %87 : vector<8x32xf32>
    %89 = tpu.concatenate %87, %88 in 1 : vector<8x32xf32>, vector<8x32xf32> -> vector<8x64xf32>
    %cst_31 = arith.constant dense<0.000000e+00> : vector<64xf32>
    %90 = vector.multi_reduction <add>, %89, %cst_31 [0] : vector<8x64xf32> to vector<64xf32>
    %91 = vector.shape_cast %90 : vector<64xf32> to vector<1x64xf32>
    %cst_32 = arith.constant 8.000000e+00 : f32
    %92 = vector.broadcast %cst_32 : f32 to vector<1x64xf32>
    %93 = arith.divf %91, %92 : vector<1x64xf32>
    %94 = vector.extract_strided_slice %93 {offsets = [0, 0], sizes = [1, 32], strides = [1, 1]} : vector<1x64xf32> to vector<1x32xf32>
    %95 = vector.extract_strided_slice %93 {offsets = [0, 32], sizes = [1, 32], strides = [1, 1]} : vector<1x64xf32> to vector<1x32xf32>
    %96 = arith.mulf %94, %94 : vector<1x32xf32>
    %97 = arith.subf %95, %96 : vector<1x32xf32>
    %cst_33 = arith.constant 0.000000e+00 : f32
    %98 = vector.broadcast %cst_33 : f32 to vector<1x32xf32>
    %99 = arith.maximumf %97, %98 : vector<1x32xf32>
    %c116 = arith.constant 116 : index
    %c0_34 = arith.constant 0 : index
    %100 = vector.load %arg2[%c116, %c0_34] : memref<123x32xf32, #tpu.memory_space<vmem>>, vector<1x32xf32>
    %cst_35 = arith.constant 9.99999974E-6 : f32
    %101 = vector.broadcast %cst_35 : f32 to vector<1x32xf32>
    %102 = arith.addf %99, %101 : vector<1x32xf32>
    %103 = math.rsqrt %102 : vector<1x32xf32>
    %104 = arith.mulf %100, %103 : vector<1x32xf32>
    %c121 = arith.constant 121 : index
    %c0_36 = arith.constant 0 : index
    %105 = vector.load %arg2[%c121, %c0_36] : memref<123x32xf32, #tpu.memory_space<vmem>>, vector<1x32xf32>
    %106 = arith.mulf %94, %104 : vector<1x32xf32>
    %107 = arith.subf %105, %106 : vector<1x32xf32>
    %108 = vector.broadcast %104 : vector<1x32xf32> to vector<8x32xf32>
    %109 = arith.mulf %87, %108 : vector<8x32xf32>
    %110 = vector.broadcast %107 : vector<1x32xf32> to vector<8x32xf32>
    %111 = arith.addf %109, %110 : vector<8x32xf32>
    %cst_37 = arith.constant 0.000000e+00 : f32
    %112 = vector.broadcast %cst_37 : f32 to vector<8x32xf32>
    %113 = arith.maximumf %111, %112 : vector<8x32xf32>
    %c112 = arith.constant 112 : index
    %c0_38 = arith.constant 0 : index
    %114 = vector.load %arg2[%c112, %c0_38] : memref<123x32xf32, #tpu.memory_space<vmem>>, vector<1x32xf32>
    %115 = vector.broadcast %114 : vector<1x32xf32> to vector<8x32xf32>
    %116 = arith.mulf %113, %115 : vector<8x32xf32>
    %cst_39 = arith.constant dense<0.000000e+00> : vector<8xf32>
    %117 = vector.multi_reduction <add>, %116, %cst_39 [1] : vector<8x32xf32> to vector<8xf32>
    %118 = vector.shape_cast %117 : vector<8xf32> to vector<8x1xf32>
    %119 = arith.mulf %118, %118 : vector<8x1xf32>
    %120 = tpu.concatenate %118, %119 in 1 : vector<8x1xf32>, vector<8x1xf32> -> vector<8x2xf32>
    %cst_40 = arith.constant dense<0.000000e+00> : vector<2xf32>
    %121 = vector.multi_reduction <add>, %120, %cst_40 [0] : vector<8x2xf32> to vector<2xf32>
    %122 = vector.shape_cast %121 : vector<2xf32> to vector<1x2xf32>
    %cst_41 = arith.constant 8.000000e+00 : f32
    %123 = vector.broadcast %cst_41 : f32 to vector<1x2xf32>
    %124 = arith.divf %122, %123 : vector<1x2xf32>
    %125 = vector.extract_strided_slice %124 {offsets = [0, 0], sizes = [1, 1], strides = [1, 1]} : vector<1x2xf32> to vector<1x1xf32>
    %126 = vector.extract_strided_slice %124 {offsets = [0, 1], sizes = [1, 1], strides = [1, 1]} : vector<1x2xf32> to vector<1x1xf32>
    %127 = arith.mulf %125, %125 : vector<1x1xf32>
    %128 = arith.subf %126, %127 : vector<1x1xf32>
    %cst_42 = arith.constant 0.000000e+00 : f32
    %129 = vector.broadcast %cst_42 : f32 to vector<1x1xf32>
    %130 = arith.maximumf %128, %129 : vector<1x1xf32>
    %c117 = arith.constant 117 : index
    %c0_43 = arith.constant 0 : index
    %131 = vector.load %arg2[%c117, %c0_43] : memref<123x32xf32, #tpu.memory_space<vmem>>, vector<1x1xf32>
    %cst_44 = arith.constant 9.99999974E-6 : f32
    %132 = vector.broadcast %cst_44 : f32 to vector<1x1xf32>
    %133 = arith.addf %130, %132 : vector<1x1xf32>
    %134 = math.rsqrt %133 : vector<1x1xf32>
    %135 = arith.mulf %131, %134 : vector<1x1xf32>
    %c122 = arith.constant 122 : index
    %c0_45 = arith.constant 0 : index
    %136 = vector.load %arg2[%c122, %c0_45] : memref<123x32xf32, #tpu.memory_space<vmem>>, vector<1x1xf32>
    %137 = arith.mulf %125, %135 : vector<1x1xf32>
    %138 = arith.subf %136, %137 : vector<1x1xf32>
    %139 = vector.broadcast %135 : vector<1x1xf32> to vector<8x1xf32>
    %140 = arith.mulf %118, %139 : vector<8x1xf32>
    %141 = vector.broadcast %138 : vector<1x1xf32> to vector<8x1xf32>
    %142 = arith.addf %140, %141 : vector<8x1xf32>
    %143 = arith.negf %142 : vector<8x1xf32>
    %144 = math.exp %143 : vector<8x1xf32>
    %cst_46 = arith.constant 1.000000e+00 : f32
    %145 = vector.broadcast %cst_46 : f32 to vector<8x1xf32>
    %146 = arith.addf %145, %144 : vector<8x1xf32>
    %147 = arith.divf %145, %146 : vector<8x1xf32>
    %148 = tpu.iota {dimensions = array<i32: 0>} : vector<8x8xi32>
    %149 = tpu.iota {dimensions = array<i32: 1>} : vector<8x8xi32>
    %150 = arith.cmpi eq, %148, %149 : vector<8x8xi32>
    %151 = arith.extui %150 : vector<8x8xi1> to vector<8x8xi32>
    %152 = arith.sitofp %151 : vector<8x8xi32> to vector<8x8xf32>
    %153 = vector.broadcast %147 : vector<8x1xf32> to vector<8x8xf32>
    %154 = arith.mulf %153, %152 : vector<8x8xf32>
    %cst_47 = arith.constant dense<0.000000e+00> : vector<8xf32>
    %155 = vector.multi_reduction <add>, %154, %cst_47 [0] : vector<8x8xf32> to vector<8xf32>
    %156 = vector.shape_cast %155 : vector<8xf32> to vector<1x8xf32>
    %c0_48 = arith.constant 0 : index
    %c0_49 = arith.constant 0 : index
    %c0_50 = arith.constant 0 : index
    %157 = vector.load %arg3[%c0_48, %c0_49, %c0_50] : memref<1x1x8xf32, #tpu.memory_space<vmem>>, vector<1x1x8xf32>
    %158 = vector.shape_cast %157 : vector<1x1x8xf32> to vector<1x8xf32>
    %159 = vector.shape_cast %156 : vector<1x8xf32> to vector<1x1x8xf32>
    tpu.vector_store %arg3[%c0_48, %c0_49, %c0_50], %159 {strides = array<i32>} : memref<1x1x8xf32, #tpu.memory_space<vmem>>, vector<1x1x8xf32>,
    return
  }
  func.func @transform_0(%arg0: i32) -> (i32, i32, i32) {
    %c0_i32 = arith.constant 0 : i32
    %c0_i32_0 = arith.constant 0 : i32
    %c0_i32_1 = arith.constant 0 : i32
    return %arg0, %c0_i32, %c0_i32_0 : i32, i32, i32
  }
  func.func @transform_1(%arg0: i32) -> (i32, i32) {
    %c0_i32 = arith.constant 0 : i32
    %c0_i32_0 = arith.constant 0 : i32
    %c0_i32_1 = arith.constant 0 : i32
    return %c0_i32, %c0_i32_0 : i32, i32
  }
  func.func @transform_2(%arg0: i32) -> (i32, i32, i32) {
    %c0_i32 = arith.constant 0 : i32
    %c0_i32_0 = arith.constant 0 : i32
    %c0_i32_1 = arith.constant 0 : i32
    return %arg0, %c0_i32, %c0_i32_0 : i32, i32, i32
  }
}

</mosaic_0001>

<llo_original>
// kernel: tpu_custom_call.1
$region0: #{tpu_custom_call.1}
  #allocation0 [shape = 'u32[]', space=smem, size = 0x4, offset = 0x4, fixed_abs, tag = 'smem constant byte address 0x4 - core index']
  #allocation1 [shape = 'u32[144,128]{1,0:T(1,128)}', space=vmem, size = 0x12000, scoped, tag = 'internal scratch']
  %s0 = inlined_call_operand.vmem [shape: f32[4,8,16], index: 0, kind: input, shape index: {}]
  %s1 = inlined_call_operand.vmem [shape: f32[123,32], index: 1, kind: input, shape index: {}]
  %s2 = inlined_call_operand.hbm [shape: f32[4,1,8], index: 2, kind: output, shape index: {}]
  %s3 = sld [smem:[#allocation0]]
  $region41: #{tpu_custom_call.1} parent=0
    _
  %s5 = ssub.s32 1, %s3
  %s6 = scalar_select 0, %s5, %s3
  $region1: #{tpu_custom_call.1} parent=0
    #allocation2 [shape = 'u8[1024]{0}', space=vmem, size = 0x400, scoped, tag = 'output window, operand 0']
    #allocation3 [shape = 's32[2]{0}', space=sflag, size = 0x8, scoped, tag = 'scoped memory for tpu_custom_call.1']
    %7 = vsyncpa [#allocation3], 0
    %s8 = scalar_lea.sflag [#allocation3], 1
    %9 = vsyncpa %s8, 0
    loop: start=0, step=1, limit=6
    $region2: #{tpu_custom_call.1} parent=1 // loop_pre_header
      _
    $region3: #{tpu_custom_call.1} parent=1 // loop_header
      %s11 = sphi 0, %s15
      %p12 = scmp.ge.s32.totalorder %s11, 6
      %s21 = sphi 0, %s23
      %s24 = sphi 0, %s21
      %s25 = sphi 0, %s24
      %s41 = sphi 0, %s25
      %s45 = sphi 0, %s45
      %s47 = sphi 0, %s45
      %s48 = sphi 0, %s47
      %s62 = sphi 0, %s48
      %s68 = sphi 0, %s70
      %s71 = sphi 0, %s68
      %s72 = sphi 0, %s71
      %s88 = sphi 0, %s72
    $region4: #{tpu_custom_call.1} parent=1 // loop_header_branch
      %14 = sbr.rel (%p12) target = $region8
    $region5: #{tpu_custom_call.1} parent=1 // loop_body
      %s16 = ssub.s32 %s11, 1
      %s17 = ssub.s32 %s11, 2
      %s18 = sadd.s32 %s11, 1
      %s19 = ssub.s32 %s11, %s18
      %p20 = scmp.eq.s32.totalorder %s19, 0
      %s22 = sadd.s32 %s21, 1
      %s23 = scalar_select %p20, %s21, %s22
      %p26 = pneg %p20
      %p27 = scmp.eq.s32.totalorder %s11, 3
      %p28 = por %p26, %p27
      %p29 = scmp.ne.s32.totalorder %s21, %s24
      %p30 = scmp.eq.s32.totalorder %s11, 0
      %p31 = por %p29, %p30
      %p32 = scmp.ne.s32.totalorder %s21, %s24
      %p33 = scmp.eq.s32.totalorder %s16, 3
      %p34 = por %p32, %p33
      %p35 = scmp.ne.s32.totalorder %s24, %s25
      %p36 = scmp.eq.s32.totalorder %s16, 0
      %p37 = por %p35, %p36
      %p38 = scmp.ne.s32.totalorder %s24, %s25
      %p39 = scmp.eq.s32.totalorder %s17, 3
      %p40 = por %p38, %p39
      %p42 = scmp.ne.s32.totalorder %s25, %s41
      %p43 = scmp.eq.s32.totalorder %s17, 0
      %p44 = por %p42, %p43
      %s46 = sadd.s32 %s45, 1
      %p49 = scmp.eq.s32.totalorder %s11, 3
      %p50 = scmp.ne.s32.totalorder %s45, %s47
      %p51 = scmp.eq.s32.totalorder %s11, 0
      %p52 = por %p50, %p51
      %p53 = scmp.ne.s32.totalorder %s45, %s47
      %p54 = scmp.eq.s32.totalorder %s16, 3
      %p55 = por %p53, %p54
      %p56 = scmp.ne.s32.totalorder %s47, %s48
      %p57 = scmp.eq.s32.totalorder %s16, 0
      %p58 = por %p56, %p57
      %p59 = scmp.ne.s32.totalorder %s47, %s48
      %p60 = scmp.eq.s32.totalorder %s17, 3
      %p61 = por %p59, %p60
      %p63 = scmp.ne.s32.totalorder %s48, %s62
      %p64 = scmp.eq.s32.totalorder %s17, 0
      %p65 = por %p63, %p64
      %s66 = ssub.s32 %s11, %s18
      %p67 = scmp.eq.s32.totalorder %s66, 0
      %s69 = sadd.s32 %s68, 1
      %s70 = scalar_select %p67, %s68, %s69
      %p73 = pneg %p67
      %p74 = scmp.eq.s32.totalorder %s11, 3
      %p75 = por %p73, %p74
      %p76 = scmp.ne.s32.totalorder %s68, %s71
      %p77 = scmp.eq.s32.totalorder %s11, 0
      %p78 = por %p76, %p77
      %p79 = scmp.ne.s32.totalorder %s68, %s71
      %p80 = scmp.eq.s32.totalorder %s16, 3
      %p81 = por %p79, %p80
      %p82 = scmp.ne.s32.totalorder %s71, %s72
      %p83 = scmp.eq.s32.totalorder %s16, 0
      %p84 = por %p82, %p83
      %p85 = scmp.ne.s32.totalorder %s71, %s72
      %p86 = scmp.eq.s32.totalorder %s17, 3
      %p87 = por %p85, %p86
      %p89 = scmp.ne.s32.totalorder %s72, %s88
      %p90 = scmp.eq.s32.totalorder %s17, 0
      %p91 = por %p89, %p90
      %p92 = scmp.le.s32.totalorder 1, %s11
      %p93 = scmp.lt.s32.totalorder %s11, 5
      %p94 = pnand %p92, %p93
      %p95 = pneg %p94
      // Predicated region
      $region9: #{tpu_custom_call.1} parent=5 // pred_check
        _
      $region10: #{tpu_custom_call.1} parent=5 // pred_check_branch
        %97 = sbr.rel (%p94) target = $region12
      $region11: #{tpu_custom_call.1} parent=5 // pred_region
        %s98 = ssub.s32 %s11, 1
        // Predicated region
        $region13: #{tpu_custom_call.1} parent=11 // pred_check
          %p99 = pneg %p58
        $region14: #{tpu_custom_call.1} parent=11 // pred_check_branch
          %101 = sbr.rel (%p99) target = $region16
        $region15: #{tpu_custom_call.1} parent=11 // pred_region
          _
        $region16: #{tpu_custom_call.1} parent=11 // pred_fallthru
          _
      $region12: #{tpu_custom_call.1} parent=5 // pred_fallthru
        _
      %p102 = scmp.lt.s32.totalorder %s11, 4
      // Predicated region
      $region17: #{tpu_custom_call.1} parent=5 // pred_check
        %p103 = pneg %p102
      $region18: #{tpu_custom_call.1} parent=5 // pred_check_branch
        %105 = sbr.rel (%p103) target = $region20
      $region19: #{tpu_custom_call.1} parent=5 // pred_region
        // Predicated region
        $region21: #{tpu_custom_call.1} parent=19 // pred_check
          %p106 = pneg %p31
        $region22: #{tpu_custom_call.1} parent=19 // pred_check_branch
          %108 = sbr.rel (%p106) target = $region24
        $region23: #{tpu_custom_call.1} parent=19 // pred_region
          %p109 = scmp.lt.s32.totalorder %s11, 3
          %s110 = scalar_select %p109, %s11, 3
          %s111 = smul.addr %s110, 8
          %s112 = scalar_lea.vmem %s0, %s111
        $region24: #{tpu_custom_call.1} parent=19 // pred_fallthru
          _
      $region20: #{tpu_custom_call.1} parent=5 // pred_fallthru
        _
      %p113 = scmp.le.s32.totalorder 1, %s11
      %p114 = scmp.lt.s32.totalorder %s11, 5
      %p115 = pnand %p113, %p114
      %p116 = pneg %p115
      // Predicated region
      $region25: #{tpu_custom_call.1} parent=5 // pred_check
        _
      $region26: #{tpu_custom_call.1} parent=5 // pred_check_branch
        %118 = sbr.rel (%p115) target = $region28
      $region27: #{tpu_custom_call.1} parent=5 // pred_region
        %s119 = ssub.s32 %s11, 1
        %p120 = scmp.lt.s32.totalorder %s16, 3
        %s121 = scalar_select %p120, %s16, 3
        %s122 = smul.addr %s121, 8
        %s123 = scalar_lea.vmem %s0, %s122
        %p124 = pneg %p37
        %p125 = pneg %p34
        %p126 = pneg %p58
        %p127 = pneg %p55
        %p128 = pneg %p84
        %p129 = pneg %p81
        %s130 = sand.u32 %s71, 1
        %s131 = scalar_lea.sflag [#allocation3], %s130
        %s132 = sand.u32 %s71, 1
        %s133 = scalar_lea.vmem [#allocation2], %s132
        %p134 = scmp.lt.s32.totalorder %s16, 3
        %s135 = scalar_select %p134, %s16, 3
        %s136 = smul.addr %s135, 8
        %s137 = scalar_lea.vmem %s0, %s136
        %v138 = vld [vmem:[%s137] sm:$0xff]
        %v139 = vld [vmem:[%s1] sm:$0xff]
        %v140 = vld [vmem:[%s1 + $0x8] sm:$0xff]
        %vm141 = vcmask 130048
        %v143 = vsel %vm141, %v138, 0
        %145 = vmatprep.subr.mxu0 0.0
        %146 = vmatpush1.msra.mxu0 %v139
        %147 = vmatprep.subr.mxu0 0.0
        %148 = vmatpush1.msra.mxu0 %v140
        %149 = vmatprep.subr.mxu0 0.0
        %150 = vmatpush1.msra.mxu0 0.0
        %151 = vmatprep.subr.mxu0 0.0
        %152 = vmatpush1.msra.mxu0 0.0
        %153 = vmatprep.subr.mxu0 0.0
        %154 = vmatpush1.msra.mxu0 0.0
        %155 = vmatprep.subr.mxu0 0.0
        %156 = vmatpush1.msra.mxu0 0.0
        %157 = vmatprep.subr.mxu0 0.0
        %158 = vmatpush1.msra.mxu0 0.0
        %159 = vmatprep.subr.mxu0 0.0
        %160 = vmatpush1.msra.mxu0 0.0
        %161 = vmatprep.subr.mxu0 0.0
        %162 = vmatpush1.msra.mxu0 0.0
        %163 = vmatprep.subr.mxu0 0.0
        %164 = vmatpush1.msra.mxu0 0.0
        %165 = vmatprep.subr.mxu0 0.0
        %166 = vmatpush1.msra.mxu0 0.0
        %167 = vmatprep.subr.mxu0 0.0
        %168 = vmatpush1.msra.mxu0 0.0
        %169 = vmatprep.subr.mxu0 0.0
        %170 = vmatpush1.msra.mxu0 0.0
        %171 = vmatprep.subr.mxu0 0.0
        %172 = vmatpush1.msra.mxu0 0.0
        %173 = vmatprep.subr.mxu0 0.0
        %174 = vmatpush1.msra.mxu0 0.0
        %175 = vmatprep.subr.mxu0 0.0
        %176 = vmatpush1.msra.mxu0 0.0
        %177 = vmatprep.subr.mxu0 0.0
        %178 = vmatpush1.msra.mxu0 0.0
        %179 = vmatprep.subr.mxu0 0.0
        %180 = vmatpush1.msra.mxu0 0.0
        %181 = vmatprep.subr.mxu0 0.0
        %182 = vmatpush1.msra.mxu0 0.0
        %183 = vmatprep.subr.mxu0 0.0
        %184 = vmatpush1.msra.mxu0 0.0
        %185 = vmatprep.subr.mxu0 0.0
        %186 = vmatpush1.msra.mxu0 0.0
        %187 = vmatprep.subr.mxu0 0.0
        %188 = vmatpush1.msra.mxu0 0.0
        %189 = vmatprep.subr.mxu0 0.0
        %190 = vmatpush1.msra.mxu0 0.0
        %191 = vmatprep.subr.mxu0 0.0
        %192 = vmatpush1.msra.mxu0 0.0
        %193 = vmatprep.subr.mxu0 0.0
        %194 = vmatpush1.msra.mxu0 0.0
        %195 = vmatprep.subr.mxu0 0.0
        %196 = vmatpush1.msra.mxu0 0.0
        %197 = vmatprep.subr.mxu0 0.0
        %198 = vmatpush1.msra.mxu0 0.0
        %199 = vmatprep.subr.mxu0 0.0
        %200 = vmatpush1.msra.mxu0 0.0
        %201 = vmatprep.subr.mxu0 0.0
        %202 = vmatpush1.msra.mxu0 0.0
        %203 = vmatprep.subr.mxu0 0.0
        %204 = vmatpush1.msra.mxu0 0.0
        %205 = vmatprep.subr.mxu0 0.0
        %206 = vmatpush1.msra.mxu0 0.0
        %207 = vmatprep.subr.mxu0 0.0
        %208 = vmatpush1.msra.mxu0 0.0
        %209 = vmatprep.mubr.f32.mxu0 0.0
        %210 = vmatmul.mubr.f32.gmra.mrb[0].mxu0 %v143
        %v211 = vpop.f32.mrb[0].mxu0
        %v212 = vadd.f32 0.0, %v211
        %v213 = vpop.f32.mrb[0].mxu0
        %214 = vdwg.mxu0
        %v215 = vmul.f32 %v212, %v212
        %217 = vrot.lane.b32.xlu0 %v215, 32
        %v218 = vpop.permute.xlu0 %217
        %vm220 = vcmask 261120
        %v221 = vsel %vm220, %v212, %v218
        %vm222 = vcmask 523264
        %v223 = vsel %vm222, %v221, 0.0
        %v224 = vrot.slane %v223, 4
        %v225 = vadd.f32 %v223, %v224
        %v226 = vrot.slane %v225, 2
        %v227 = vadd.f32 %v225, %v226
        %v228 = vrot.slane %v227, 1
        %v229 = vadd.f32 %v227, %v228
        %v230 = vrcp.pop 8.0
        %v231 = vmul.f32 %v229, %v230
        %v232 = vmul.f32 %v231, %v231
        %234 = vrot.lane.b32.xlu0 %v232, 32
        %v235 = vpop.permute.xlu0 %234
        %v237 = vsub.f32 %v231, %v235
        %v238 = vmax.f32 %v237, 0.0
        %v239 = vld [vmem:[%s1 + $0x71] sm:$0x1]
        %v240 = vadd.f32 %v238, 1e-05
        %v241 = vrsqrt.pop %v240
        %243 = vrot.lane.b32.xlu0 %v241, 96
        %v244 = vpop.permute.xlu0 %243
        %v246 = vmul.f32 %v239, %v244
        %v247 = vld [vmem:[%s1 + $0x76] sm:$0x1]
        %v248 = vmul.f32 %v231, %v246
        %v249 = vsub.f32 %v247, %v248
        %v250 = vlaneseq
        %v251 = vshrl.u32 %v250, 7
        %v252 = vsub.s32 0, %v251
        %v253 = vrot.slane %v246, %v252
        %v254 = vmul.f32 %v212, %v253
        %v255 = vlaneseq
        %v256 = vshrl.u32 %v255, 7
        %v257 = vsub.s32 0, %v256
        %v258 = vrot.slane %v249, %v257
        %v259 = vadd.f32 %v254, %v258
        %v260 = vmax.f32 %v259, 0.0
        %v261 = vld [vmem:[%s1 + $0x10] sm:$0xff]
        %v262 = vld [vmem:[%s1 + $0x18] sm:$0xff]
        %v263 = vld [vmem:[%s1 + $0x20] sm:$0xff]
        %v264 = vld [vmem:[%s1 + $0x28] sm:$0xff]
        %v266 = vsel %vm220, %v260, 0
        %268 = vmatprep.subr.mxu0 0.0
        %269 = vmatpush1.msra.mxu0 %v261
        %270 = vmatprep.subr.mxu0 0.0
        %271 = vmatpush1.msra.mxu0 %v262
        %272 = vmatprep.subr.mxu0 0.0
        %273 = vmatpush1.msra.mxu0 %v263
        %274 = vmatprep.subr.mxu0 0.0
        %275 = vmatpush1.msra.mxu0 %v264
        %276 = vmatprep.subr.mxu0 0.0
        %277 = vmatpush1.msra.mxu0 0.0
        %278 = vmatprep.subr.mxu0 0.0
        %279 = vmatpush1.msra.mxu0 0.0
        %280 = vmatprep.subr.mxu0 0.0
        %281 = vmatpush1.msra.mxu0 0.0
        %282 = vmatprep.subr.mxu0 0.0
        %283 = vmatpush1.msra.mxu0 0.0
        %284 = vmatprep.subr.mxu0 0.0
        %285 = vmatpush1.msra.mxu0 0.0
        %286 = vmatprep.subr.mxu0 0.0
        %287 = vmatpush1.msra.mxu0 0.0
        %288 = vmatprep.subr.mxu0 0.0
        %289 = vmatpush1.msra.mxu0 0.0
        %290 = vmatprep.subr.mxu0 0.0
        %291 = vmatpush1.msra.mxu0 0.0
        %292 = vmatprep.subr.mxu0 0.0
        %293 = vmatpush1.msra.mxu0 0.0
        %294 = vmatprep.subr.mxu0 0.0
        %295 = vmatpush1.msra.mxu0 0.0
        %296 = vmatprep.subr.mxu0 0.0
        %297 = vmatpush1.msra.mxu0 0.0
        %298 = vmatprep.subr.mxu0 0.0
        %299 = vmatpush1.msra.mxu0 0.0
        %300 = vmatprep.subr.mxu0 0.0
        %301 = vmatpush1.msra.mxu0 0.0
        %302 = vmatprep.subr.mxu0 0.0
        %303 = vmatpush1.msra.mxu0 0.0
        %304 = vmatprep.subr.mxu0 0.0
        %305 = vmatpush1.msra.mxu0 0.0
        %306 = vmatprep.subr.mxu0 0.0
        %307 = vmatpush1.msra.mxu0 0.0
        %308 = vmatprep.subr.mxu0 0.0
        %309 = vmatpush1.msra.mxu0 0.0
        %310 = vmatprep.subr.mxu0 0.0
        %311 = vmatpush1.msra.mxu0 0.0
        %312 = vmatprep.subr.mxu0 0.0
        %313 = vmatpush1.msra.mxu0 0.0
        %314 = vmatprep.subr.mxu0 0.0
        %315 = vmatpush1.msra.mxu0 0.0
        %316 = vmatprep.subr.mxu0 0.0
        %317 = vmatpush1.msra.mxu0 0.0
        %318 = vmatprep.subr.mxu0 0.0
        %319 = vmatpush1.msra.mxu0 0.0
        %320 = vmatprep.subr.mxu0 0.0
        %321 = vmatpush1.msra.mxu0 0.0
        %322 = vmatprep.subr.mxu0 0.0
        %323 = vmatpush1.msra.mxu0 0.0
        %324 = vmatprep.subr.mxu0 0.0
        %325 = vmatpush1.msra.mxu0 0.0
        %326 = vmatprep.subr.mxu0 0.0
        %327 = vmatpush1.msra.mxu0 0.0
        %328 = vmatprep.subr.mxu0 0.0
        %329 = vmatpush1.msra.mxu0 0.0
        %330 = vmatprep.subr.mxu0 0.0
        %331 = vmatpush1.msra.mxu0 0.0
        %332 = vmatprep.mubr.f32.mxu0 0.0
        %333 = vmatmul.mubr.f32.gmra.mrb[0].mxu0 %v266
        %v334 = vpop.f32.mrb[0].mxu0
        %v335 = vadd.f32 0.0, %v334
        %v336 = vpop.f32.mrb[0].mxu0
        %337 = vdwg.mxu0
        %v338 = vmul.f32 %v335, %v335
        %340 = vrot.lane.b32.xlu0 %v338, 32
        %v341 = vpop.permute.xlu0 %340
        %v343 = vsel %vm220, %v335, %v341
        %v344 = vsel %vm222, %v343, 0.0
        %v345 = vrot.slane %v344, 4
        %v346 = vadd.f32 %v344, %v345
        %v347 = vrot.slane %v346, 2
        %v348 = vadd.f32 %v346, %v347
        %v349 = vrot.slane %v348, 1
        %v350 = vadd.f32 %v348, %v349
        %v351 = vmul.f32 %v350, %v230
        %v352 = vmul.f32 %v351, %v351
        %354 = vrot.lane.b32.xlu0 %v352, 32
        %v355 = vpop.permute.xlu0 %354
        %v357 = vsub.f32 %v351, %v355
        %v358 = vmax.f32 %v357, 0.0
        %v359 = vld [vmem:[%s1 + $0x72] sm:$0x1]
        %v360 = vadd.f32 %v358, 1e-05
        %v361 = vrsqrt.pop %v360
        %363 = vrot.lane.b32.xlu0 %v361, 96
        %v364 = vpop.permute.xlu0 %363
        %v366 = vmul.f32 %v359, %v364
        %v367 = vld [vmem:[%s1 + $0x77] sm:$0x1]
        %v368 = vmul.f32 %v351, %v366
        %v369 = vsub.f32 %v367, %v368
        %v370 = vlaneseq
        %v371 = vshrl.u32 %v370, 7
        %v372 = vsub.s32 0, %v371
        %v373 = vrot.slane %v366, %v372
        %v374 = vmul.f32 %v335, %v373
        %v375 = vlaneseq
        %v376 = vshrl.u32 %v375, 7
        %v377 = vsub.s32 0, %v376
        %v378 = vrot.slane %v369, %v377
        %v379 = vadd.f32 %v374, %v378
        %v380 = vmax.f32 %v379, 0.0
        %v381 = vld [vmem:[%s1 + $0x30] sm:$0xff]
        %v382 = vld [vmem:[%s1 + $0x38] sm:$0xff]
        %v383 = vld [vmem:[%s1 + $0x40] sm:$0xff]
        %v384 = vld [vmem:[%s1 + $0x48] sm:$0xff]
        %v386 = vsel %vm220, %v380, 0
        %388 = vmatprep.subr.mxu0 0.0
        %389 = vmatpush1.msra.mxu0 %v381
        %390 = vmatprep.subr.mxu0 0.0
        %391 = vmatpush1.msra.mxu0 %v382
        %392 = vmatprep.subr.mxu0 0.0
        %393 = vmatpush1.msra.mxu0 %v383
        %394 = vmatprep.subr.mxu0 0.0
        %395 = vmatpush1.msra.mxu0 %v384
        %396 = vmatprep.subr.mxu0 0.0
        %397 = vmatpush1.msra.mxu0 0.0
        %398 = vmatprep.subr.mxu0 0.0
        %399 = vmatpush1.msra.mxu0 0.0
        %400 = vmatprep.subr.mxu0 0.0
        %401 = vmatpush1.msra.mxu0 0.0
        %402 = vmatprep.subr.mxu0 0.0
        %403 = vmatpush1.msra.mxu0 0.0
        %404 = vmatprep.subr.mxu0 0.0
        %405 = vmatpush1.msra.mxu0 0.0
        %406 = vmatprep.subr.mxu0 0.0
        %407 = vmatpush1.msra.mxu0 0.0
        %408 = vmatprep.subr.mxu0 0.0
        %409 = vmatpush1.msra.mxu0 0.0
        %410 = vmatprep.subr.mxu0 0.0
        %411 = vmatpush1.msra.mxu0 0.0
        %412 = vmatprep.subr.mxu0 0.0
        %413 = vmatpush1.msra.mxu0 0.0
        %414 = vmatprep.subr.mxu0 0.0
        %415 = vmatpush1.msra.mxu0 0.0
        %416 = vmatprep.subr.mxu0 0.0
        %417 = vmatpush1.msra.mxu0 0.0
        %418 = vmatprep.subr.mxu0 0.0
        %419 = vmatpush1.msra.mxu0 0.0
        %420 = vmatprep.subr.mxu0 0.0
        %421 = vmatpush1.msra.mxu0 0.0
        %422 = vmatprep.subr.mxu0 0.0
        %423 = vmatpush1.msra.mxu0 0.0
        %424 = vmatprep.subr.mxu0 0.0
        %425 = vmatpush1.msra.mxu0 0.0
        %426 = vmatprep.subr.mxu0 0.0
        %427 = vmatpush1.msra.mxu0 0.0
        %428 = vmatprep.subr.mxu0 0.0
        %429 = vmatpush1.msra.mxu0 0.0
        %430 = vmatprep.subr.mxu0 0.0
        %431 = vmatpush1.msra.mxu0 0.0
        %432 = vmatprep.subr.mxu0 0.0
        %433 = vmatpush1.msra.mxu0 0.0
        %434 = vmatprep.subr.mxu0 0.0
        %435 = vmatpush1.msra.mxu0 0.0
        %436 = vmatprep.subr.mxu0 0.0
        %437 = vmatpush1.msra.mxu0 0.0
        %438 = vmatprep.subr.mxu0 0.0
        %439 = vmatpush1.msra.mxu0 0.0
        %440 = vmatprep.subr.mxu0 0.0
        %441 = vmatpush1.msra.mxu0 0.0
        %442 = vmatprep.subr.mxu0 0.0
        %443 = vmatpush1.msra.mxu0 0.0
        %444 = vmatprep.subr.mxu0 0.0
        %445 = vmatpush1.msra.mxu0 0.0
        %446 = vmatprep.subr.mxu0 0.0
        %447 = vmatpush1.msra.mxu0 0.0
        %448 = vmatprep.subr.mxu0 0.0
        %449 = vmatpush1.msra.mxu0 0.0
        %450 = vmatprep.subr.mxu0 0.0
        %451 = vmatpush1.msra.mxu0 0.0
        %452 = vmatprep.mubr.f32.mxu0 0.0
        %453 = vmatmul.mubr.f32.gmra.mrb[0].mxu0 %v386
        %v454 = vpop.f32.mrb[0].mxu0
        %v455 = vadd.f32 0.0, %v454
        %v456 = vpop.f32.mrb[0].mxu0
        %457 = vdwg.mxu0
        %v458 = vmul.f32 %v455, %v455
        %460 = vrot.lane.b32.xlu0 %v458, 32
        %v461 = vpop.permute.xlu0 %460
        %v463 = vsel %vm220, %v455, %v461
        %v464 = vsel %vm222, %v463, 0.0
        %v465 = vrot.slane %v464, 4
        %v466 = vadd.f32 %v464, %v465
        %v467 = vrot.slane %v466, 2
        %v468 = vadd.f32 %v466, %v467
        %v469 = vrot.slane %v468, 1
        %v470 = vadd.f32 %v468, %v469
        %v471 = vmul.f32 %v470, %v230
        %v472 = vmul.f32 %v471, %v471
        %474 = vrot.lane.b32.xlu0 %v472, 32
        %v475 = vpop.permute.xlu0 %474
        %v477 = vsub.f32 %v471, %v475
        %v478 = vmax.f32 %v477, 0.0
        %v479 = vld [vmem:[%s1 + $0x73] sm:$0x1]
        %v480 = vadd.f32 %v478, 1e-05
        %v481 = vrsqrt.pop %v480
        %483 = vrot.lane.b32.xlu0 %v481, 96
        %v484 = vpop.permute.xlu0 %483
        %v486 = vmul.f32 %v479, %v484
        %v487 = vld [vmem:[%s1 + $0x78] sm:$0x1]
        %v488 = vmul.f32 %v471, %v486
        %v489 = vsub.f32 %v487, %v488
        %v490 = vlaneseq
        %v491 = vshrl.u32 %v490, 7
        %v492 = vsub.s32 0, %v491
        %v493 = vrot.slane %v486, %v492
        %v494 = vmul.f32 %v455, %v493
        %v495 = vlaneseq
        %v496 = vshrl.u32 %v495, 7
        %v497 = vsub.s32 0, %v496
        %v498 = vrot.slane %v489, %v497
        %v499 = vadd.f32 %v494, %v498
        %v500 = vmax.f32 %v499, 0.0
        %v501 = vld [vmem:[%s1 + $0x50] sm:$0xff]
        %v502 = vld [vmem:[%s1 + $0x58] sm:$0xff]
        %v503 = vld [vmem:[%s1 + $0x60] sm:$0xff]
        %v504 = vld [vmem:[%s1 + $0x68] sm:$0xff]
        %v506 = vsel %vm220, %v500, 0
        %508 = vmatprep.subr.mxu0 0.0
        %509 = vmatpush1.msra.mxu0 %v501
        %510 = vmatprep.subr.mxu0 0.0
        %511 = vmatpush1.msra.mxu0 %v502
        %512 = vmatprep.subr.mxu0 0.0
        %513 = vmatpush1.msra.mxu0 %v503
        %514 = vmatprep.subr.mxu0 0.0
        %515 = vmatpush1.msra.mxu0 %v504
        %516 = vmatprep.subr.mxu0 0.0
        %517 = vmatpush1.msra.mxu0 0.0
        %518 = vmatprep.subr.mxu0 0.0
        %519 = vmatpush1.msra.mxu0 0.0
        %520 = vmatprep.subr.mxu0 0.0
        %521 = vmatpush1.msra.mxu0 0.0
        %522 = vmatprep.subr.mxu0 0.0
        %523 = vmatpush1.msra.mxu0 0.0
        %524 = vmatprep.subr.mxu0 0.0
        %525 = vmatpush1.msra.mxu0 0.0
        %526 = vmatprep.subr.mxu0 0.0
        %527 = vmatpush1.msra.mxu0 0.0
        %528 = vmatprep.subr.mxu0 0.0
        %529 = vmatpush1.msra.mxu0 0.0
        %530 = vmatprep.subr.mxu0 0.0
        %531 = vmatpush1.msra.mxu0 0.0
        %532 = vmatprep.subr.mxu0 0.0
        %533 = vmatpush1.msra.mxu0 0.0
        %534 = vmatprep.subr.mxu0 0.0
        %535 = vmatpush1.msra.mxu0 0.0
        %536 = vmatprep.subr.mxu0 0.0
        %537 = vmatpush1.msra.mxu0 0.0
        %538 = vmatprep.subr.mxu0 0.0
        %539 = vmatpush1.msra.mxu0 0.0
        %540 = vmatprep.subr.mxu0 0.0
        %541 = vmatpush1.msra.mxu0 0.0
        %542 = vmatprep.subr.mxu0 0.0
        %543 = vmatpush1.msra.mxu0 0.0
        %544 = vmatprep.subr.mxu0 0.0
        %545 = vmatpush1.msra.mxu0 0.0
        %546 = vmatprep.subr.mxu0 0.0
        %547 = vmatpush1.msra.mxu0 0.0
        %548 = vmatprep.subr.mxu0 0.0
        %549 = vmatpush1.msra.mxu0 0.0
        %550 = vmatprep.subr.mxu0 0.0
        %551 = vmatpush1.msra.mxu0 0.0
        %552 = vmatprep.subr.mxu0 0.0
        %553 = vmatpush1.msra.mxu0 0.0
        %554 = vmatprep.subr.mxu0 0.0
        %555 = vmatpush1.msra.mxu0 0.0
        %556 = vmatprep.subr.mxu0 0.0
        %557 = vmatpush1.msra.mxu0 0.0
        %558 = vmatprep.subr.mxu0 0.0
        %559 = vmatpush1.msra.mxu0 0.0
        %560 = vmatprep.subr.mxu0 0.0
        %561 = vmatpush1.msra.mxu0 0.0
        %562 = vmatprep.subr.mxu0 0.0
        %563 = vmatpush1.msra.mxu0 0.0
        %564 = vmatprep.subr.mxu0 0.0
        %565 = vmatpush1.msra.mxu0 0.0
        %566 = vmatprep.subr.mxu0 0.0
        %567 = vmatpush1.msra.mxu0 0.0
        %568 = vmatprep.subr.mxu0 0.0
        %569 = vmatpush1.msra.mxu0 0.0
        %570 = vmatprep.subr.mxu0 0.0
        %571 = vmatpush1.msra.mxu0 0.0
        %572 = vmatprep.mubr.f32.mxu0 0.0
        %573 = vmatmul.mubr.f32.gmra.mrb[0].mxu0 %v506
        %v574 = vpop.f32.mrb[0].mxu0
        %v575 = vadd.f32 0.0, %v574
        %v576 = vpop.f32.mrb[0].mxu0
        %577 = vdwg.mxu0
        %v578 = vmul.f32 %v575, %v575
        %580 = vrot.lane.b32.xlu0 %v578, 32
        %v581 = vpop.permute.xlu0 %580
        %v583 = vsel %vm220, %v575, %v581
        %v584 = vsel %vm222, %v583, 0.0
        %v585 = vrot.slane %v584, 4
        %v586 = vadd.f32 %v584, %v585
        %v587 = vrot.slane %v586, 2
        %v588 = vadd.f32 %v586, %v587
        %v589 = vrot.slane %v588, 1
        %v590 = vadd.f32 %v588, %v589
        %v591 = vmul.f32 %v590, %v230
        %v592 = vmul.f32 %v591, %v591
        %594 = vrot.lane.b32.xlu0 %v592, 32
        %v595 = vpop.permute.xlu0 %594
        %v597 = vsub.f32 %v591, %v595
        %v598 = vmax.f32 %v597, 0.0
        %v599 = vld [vmem:[%s1 + $0x74] sm:$0x1]
        %v600 = vadd.f32 %v598, 1e-05
        %v601 = vrsqrt.pop %v600
        %603 = vrot.lane.b32.xlu0 %v601, 96
        %v604 = vpop.permute.xlu0 %603
        %v606 = vmul.f32 %v599, %v604
        %v607 = vld [vmem:[%s1 + $0x79] sm:$0x1]
        %v608 = vmul.f32 %v591, %v606
        %v609 = vsub.f32 %v607, %v608
        %v610 = vlaneseq
        %v611 = vshrl.u32 %v610, 7
        %v612 = vsub.s32 0, %v611
        %v613 = vrot.slane %v606, %v612
        %v614 = vmul.f32 %v575, %v613
        %v615 = vlaneseq
        %v616 = vshrl.u32 %v615, 7
        %v617 = vsub.s32 0, %v616
        %v618 = vrot.slane %v609, %v617
        %v619 = vadd.f32 %v614, %v618
        %v620 = vmax.f32 %v619, 0.0
        %v621 = vld [vmem:[%s1 + $0x70] sm:$0x1]
        %v622 = vlaneseq
        %v623 = vshrl.u32 %v622, 7
        %v624 = vsub.s32 0, %v623
        %v625 = vrot.slane %v621, %v624
        %v626 = vmul.f32 %v620, %v625
        %v627 = vsel %vm220, %v626, 0.0
        %628 = vadd.xlane.f32.xlu0 %v627
        %v629 = vpop.xlane.xlu0 %628
        %v630 = vmul.f32 %v629, %v629
        %vm631 = vcmask 7168
        %v632 = vsel %vm631, %v629, %v630
        %vm633 = vcmask 15360
        %v634 = vsel %vm633, %v632, 0.0
        %v635 = vrot.slane %v634, 4
        %v636 = vadd.f32 %v634, %v635
        %v637 = vrot.slane %v636, 2
        %v638 = vadd.f32 %v636, %v637
        %v639 = vrot.slane %v638, 1
        %v640 = vadd.f32 %v638, %v639
        %v641 = vmul.f32 %v640, %v230
        %v642 = vmul.f32 %v641, %v641
        %644 = vrot.lane.b32.xlu0 %v642, 1
        %v645 = vpop.permute.xlu0 %644
        %v647 = vsub.f32 %v641, %v645
        %v648 = vmax.f32 %v647, 0.0
        %v649 = vld [vmem:[%s1 + $0x75] sm:$0x1]
        %v650 = vadd.f32 %v648, 1e-05
        %v651 = vrsqrt.pop %v650
        %653 = vrot.lane.b32.xlu0 %v651, 127
        %v654 = vpop.permute.xlu0 %653
        %v656 = vmul.f32 %v649, %v654
        %v657 = vld [vmem:[%s1 + $0x7a] sm:$0x1]
        %v658 = vmul.f32 %v641, %v656
        %v659 = vsub.f32 %v657, %v658
        %v660 = vlaneseq
        %v661 = vshrl.u32 %v660, 7
        %v662 = vsub.s32 0, %v661
        %v663 = vrot.slane %v656, %v662
        %v664 = vmul.f32 %v629, %v663
        %v665 = vlaneseq
        %v666 = vshrl.u32 %v665, 7
        %v667 = vsub.s32 0, %v666
        %v668 = vrot.slane %v659, %v667
        %v669 = vadd.f32 %v664, %v668
        %v670 = vxor.u32 %v669, 2147483648
        %v671 = vmul.f32 %v670, 1.442695
        %v672 = vpow.pop %v671
        %v673 = vadd.f32 %v672, 1.0
        %v674 = vrcp.pop %v673
        %v675 = vmul.f32 1.0, %v674
        %v676 = vlaneseq
        %v677 = vshrl.u32 %v676, 7
        %v678 = vlaneseq
        %v679 = vand.u32 %v678, 127
        %vm680 = vcmp.eq.s32.totalorder %v677, %v679
        %v681 = vsel %vm680, 1, 0
        %v682 = vcvt.s32.f32 %v681
        %684 = vset.pattern.permute.xlu0 0
        %685 = vperm.xlu0 %684, %v675
        %v686 = vpop.permute.xlu0 %685
        %v688 = vmul.f32 %v686, %v682
        %vm689 = vcmask 64512
        %v690 = vsel %vm689, %v688, 0.0
        %v691 = vrot.slane %v690, 4
        %v692 = vadd.f32 %v690, %v691
        %v693 = vrot.slane %v692, 2
        %v694 = vadd.f32 %v692, %v693
        %v695 = vrot.slane %v694, 1
        %v696 = vadd.f32 %v694, %v695
        %vm697 = vcmask 57344
        %698 = vst.msk [vmem:[%s133] sm:$0x1] %vm697, %v696
        %s699 = sand.u32 %s71, 1
        %s700 = scalar_lea.sflag [#allocation3], %s699
        %s701 = sand.u32 %s71, 1
        %s702 = scalar_lea.vmem [#allocation2], %s701
        // Predicated region
        $region29: #{tpu_custom_call.1} parent=27 // pred_check
          %p703 = pneg %p81
        $region30: #{tpu_custom_call.1} parent=27 // pred_check_branch
          %705 = sbr.rel (%p703) target = $region32
        $region31: #{tpu_custom_call.1} parent=27 // pred_region
          %s707 = ssub.s32 16, 16
          %708 = vsyncadd %s700, %s707
          %s709 = smul.addr %s16, 16
          %s710 = scalar_lea.hbm %s2, %s709
          %s712 = sshll.u32 %s702, 4
          %s713 = int_to_ptr.vmem [resolvable:$true] %s712
          %715 = dma.vmem_to_hbm [thread:$0]  %s713, 16, %s710, %s700
        $region32: #{tpu_custom_call.1} parent=27 // pred_fallthru
          _
      $region28: #{tpu_custom_call.1} parent=5 // pred_fallthru
        _
      %p716 = scmp.le.s32.totalorder 2, %s11
      // Predicated region
      $region33: #{tpu_custom_call.1} parent=5 // pred_check
        %p717 = pneg %p716
      $region34: #{tpu_custom_call.1} parent=5 // pred_check_branch
        %719 = sbr.rel (%p717) target = $region36
      $region35: #{tpu_custom_call.1} parent=5 // pred_region
        %s720 = ssub.s32 %s11, 2
        // Predicated region
        $region37: #{tpu_custom_call.1} parent=35 // pred_check
          %p721 = pneg %p87
        $region38: #{tpu_custom_call.1} parent=35 // pred_check_branch
          %723 = sbr.rel (%p721) target = $region40
        $region39: #{tpu_custom_call.1} parent=35 // pred_region
          %s724 = sand.u32 %s72, 1
          %s725 = scalar_lea.sflag [#allocation3], %s724
          %s726 = sand.u32 %s72, 1
          %s727 = scalar_lea.vmem [#allocation2], %s726
          %728 = dma.done %s725, 16
        $region40: #{tpu_custom_call.1} parent=35 // pred_fallthru
          _
      $region36: #{tpu_custom_call.1} parent=5 // pred_fallthru
        _
    $region6: #{tpu_custom_call.1} parent=1 // loop_footer
      %s15 = sadd.s32 1, %s11
    $region7: #{tpu_custom_call.1} parent=1 // loop_footer_branch
      %10 = sbr.rel target = $region3
    $region8: #{tpu_custom_call.1} parent=1 // loop_exit
      _
    %729 = vsyncpa [#allocation3], 1
    %s730 = scalar_lea.sflag [#allocation3], 1
    %731 = vsyncpa %s730, 1

</llo_original>
